<compile_context>
chip_gen: v5e
topology: v5e:2x2
jax: 0.10.0
libtpu: 0.0.40
codegen_flags: <defaults>
</compile_context>

<pallas_src>
import jax
import jax.numpy as jnp
from jax.experimental import pallas as pl
from jax.experimental.pallas import tpu as pltpu

IN_FEATURES = 4
HIDDEN = 128
NUM_ACTIONS = 2
_MIN_ROWS_PER_SPLIT = 512  # batch rows per core worth splitting the grid for (v7x)


def policy_kernel(x_ref, w1_ref, b1_ref, wh_ref, bh_ref, prob_ref, val_ref):
    x = x_ref[...]                       # (TB, 4)
    w1 = w1_ref[...]                     # (4, 128)

    # --- Layer 1 (4 -> 128) on the VPU: 4 broadcast FMAs, no MXU ---
    h = (x[:, 0:1] * w1[0:1, :]
         + x[:, 1:2] * w1[1:2, :]
         + x[:, 2:3] * w1[2:3, :]
         + x[:, 3:4] * w1[3:4, :]
         + b1_ref[...])                  # (TB, 128)
    h = jnp.maximum(h, 0.0)

    # --- Fused heads (128 -> 128) in one MXU matmul; only cols 0..2 live ---
    heads = jnp.dot(h, wh_ref[...], preferred_element_type=jnp.float32)
    bh = bh_ref[...]                     # (1, 128): cols 0,1 = action bias, 2 = value bias
    l0 = heads[:, 0:1] + bh[0:1, 0:1]
    l1 = heads[:, 1:2] + bh[0:1, 1:2]
    v = heads[:, 2:3] + bh[0:1, 2:3]

    # --- 2-way softmax as a logistic: one EUP exp, exact divide (1e-5 tol) ---
    p0 = 1.0 / (1.0 + jnp.exp(l1 - l0))
    p1 = 1.0 - p0

    prob_ref[...] = jnp.concatenate([p0, p1], axis=-1)   # (TB, 2) narrow output
    val_ref[...] = v                                      # (TB, 1) narrow output


def fuse_head_params(w2, b2, w3, b3):
    """Pack action head (128,2)/(1,2) and value head (128,1)/(1,1) into one
    (128,128) weight and one (1,128) bias (cols 0:2 logits, col 2 value).
    Call ONCE at init / parameter-update time, not per forward."""
    w_head = jnp.zeros((HIDDEN, HIDDEN), jnp.float32)
    w_head = w_head.at[:, 0:NUM_ACTIONS].set(w2)
    w_head = w_head.at[:, NUM_ACTIONS:NUM_ACTIONS + 1].set(w3)
    b_head = jnp.zeros((1, HIDDEN), jnp.float32)
    b_head = b_head.at[:, 0:NUM_ACTIONS].set(b2)
    b_head = b_head.at[:, NUM_ACTIONS:NUM_ACTIONS + 1].set(b3)
    return w_head, b_head


def _tile_plan(B, block_b):
    """Near-exact batch tiling: cover B with <= block_b rows per tile, pad only
    to a multiple of 8 per tile, and use >= 2 tiles for large batches so the
    'parallel' grid axis can split across v7x megacore TensorCores."""
    num_blocks = pl.cdiv(B, block_b)
    if B >= 2 * _MIN_ROWS_PER_SPLIT:
        num_blocks = max(num_blocks, 2)
    TB = 8 * pl.cdiv(B, 8 * num_blocks)
    Bp = TB * num_blocks
    return TB, Bp, num_blocks


def policy_forward(x, w1, b1, w_head, b_head, *, block_b=2048):
    B = x.shape[0]
    TB, Bp, num_blocks = _tile_plan(B, block_b)
    if Bp != B:
        x = jnp.pad(x, ((0, Bp - B), (0, 0)))

    prob, val = pl.pallas_call(
        policy_kernel,
        out_shape=(
            jax.ShapeDtypeStruct((Bp, NUM_ACTIONS), jnp.float32),
            jax.ShapeDtypeStruct((Bp, 1), jnp.float32),
        ),
        grid=(num_blocks,),
        in_specs=[
            pl.BlockSpec((TB, IN_FEATURES), lambda i: (i, 0)),      # x tile
            pl.BlockSpec((IN_FEATURES, HIDDEN), lambda i: (0, 0)),  # W1 (resident)
            pl.BlockSpec((1, HIDDEN), lambda i: (0, 0)),            # b1
            pl.BlockSpec((HIDDEN, HIDDEN), lambda i: (0, 0)),       # fused head W
            pl.BlockSpec((1, HIDDEN), lambda i: (0, 0)),            # fused head b
        ],
        out_specs=(
            pl.BlockSpec((TB, NUM_ACTIONS), lambda i: (i, 0)),      # prob (narrow)
            pl.BlockSpec((TB, 1), lambda i: (i, 0)),                # value (narrow)
        ),
        compiler_params=pltpu.CompilerParams(
            dimension_semantics=("parallel",),        # batch axis -> megacore
            vmem_limit_bytes=32 * 1024 * 1024,        # ~5 KB/row @ TB=2048 fits easily
        ),
    )(x, w1, b1, w_head, b_head)

    return prob[:B], val[:B]


def init_params(key):
    # nn.Linear-style init: U(-1/sqrt(fan_in), 1/sqrt(fan_in)).
    # Weights are stored (in, out) — transposed relative to PyTorch's (out, in).
    k1, k2, k3, k4, k5, k6 = jax.random.split(key, 6)

    def u(k, shape, fan_in):
        bound = 1.0 / jnp.sqrt(jnp.float32(fan_in))
        return jax.random.uniform(k, shape, jnp.float32, -bound, bound)

    w1 = u(k1, (IN_FEATURES, HIDDEN), IN_FEATURES)
    b1 = u(k2, (1, HIDDEN), IN_FEATURES)
    w2 = u(k3, (HIDDEN, NUM_ACTIONS), HIDDEN)
    b2 = u(k4, (1, NUM_ACTIONS), HIDDEN)
    w3 = u(k5, (HIDDEN, 1), HIDDEN)
    b3 = u(k6, (1, 1), HIDDEN)
    return w1, b1, w2, b2, w3, b3


def policy_ref(x, w1, b1, w2, b2, w3, b3):
    h = jnp.maximum(x @ w1 + b1, 0.0)
    logits = h @ w2 + b2
    prob = jax.nn.softmax(logits, axis=-1)
    val = h @ w3 + b3
    return prob, val


if __name__ == "__main__":
    key = jax.random.PRNGKey(0)
    kx, kx2, kx3, kp = jax.random.split(key, 4)
    w1, b1, w2, b2, w3, b3 = init_params(kp)

    # Fused head params built once (not per forward call).
    w_head, b_head = fuse_head_params(w2, b2, w3, b3)
    fwd = jax.jit(policy_forward)   # keep padding/slicing fused with the kernel launch

    # Small CartPole-style batch.
    B = 8
    x = jax.random.normal(kx, (B, IN_FEATURES), jnp.float32)
    prob, val = fwd(x, w1, b1, w_head, b_head)
    jax.block_until_ready((prob, val))

    prob_r, val_r = policy_ref(x, w1, b1, w2, b2, w3, b3)
    assert prob.shape == (B, NUM_ACTIONS) and val.shape == (B, 1)
    assert jnp.allclose(prob, prob_r, atol=1e-5, rtol=1e-5)
    assert jnp.allclose(val, val_r, atol=1e-5, rtol=1e-5)
    assert jnp.allclose(jnp.sum(prob, axis=-1), 1.0, atol=1e-5)

    # Padding path: B=300 now pads only to 304 (was 512).
    B2 = 300
    x2 = jax.random.normal(kx2, (B2, IN_FEATURES), jnp.float32)
    prob2, val2 = fwd(x2, w1, b1, w_head, b_head)
    jax.block_until_ready((prob2, val2))
    prob2_r, val2_r = policy_ref(x2, w1, b1, w2, b2, w3, b3)
    assert prob2.shape == (B2, NUM_ACTIONS) and val2.shape == (B2, 1)
    assert jnp.allclose(prob2, prob2_r, atol=1e-5, rtol=1e-5)
    assert jnp.allclose(val2, val2_r, atol=1e-5, rtol=1e-5)

    # Multi-block grid path (>= 2 tiles so megacore can split the batch).
    B3 = 2500
    x3 = jax.random.normal(kx3, (B3, IN_FEATURES), jnp.float32)
    prob3, val3 = fwd(x3, w1, b1, w_head, b_head)
    jax.block_until_ready((prob3, val3))
    prob3_r, val3_r = policy_ref(x3, w1, b1, w2, b2, w3, b3)
    assert prob3.shape == (B3, NUM_ACTIONS) and val3.shape == (B3, 1)
    assert jnp.allclose(prob3, prob3_r, atol=1e-5, rtol=1e-5)
    assert jnp.allclose(val3, val3_r, atol=1e-5, rtol=1e-5)

    print("KERNEL_OK")
</pallas_src>

<mosaic_0001>
module attributes {stable_mosaic.version = 11 : i64} {
  func.func @policy_kernel(%arg0: i32, %arg1: memref<8x4xf32, #tpu.memory_space<vmem>>, %arg2: memref<4x128xf32, #tpu.memory_space<vmem>>, %arg3: memref<1x128xf32, #tpu.memory_space<vmem>>, %arg4: memref<128x128xf32, #tpu.memory_space<vmem>>, %arg5: memref<1x128xf32, #tpu.memory_space<vmem>>, %arg6: memref<8x2xf32, #tpu.memory_space<vmem>>, %arg7: memref<8x1xf32, #tpu.memory_space<vmem>>) attributes {dimension_semantics = [#tpu.dimension_semantics<parallel>], iteration_bounds = array<i64: 1>, scalar_prefetch = 0 : i64, scratch_operands = 0 : i64, tpu.core_type = #tpu.core_type<tc>, window_params = [{transform_indices = @transform_0, window_bounds = array<i64: 8, 4>}, {pipeline_mode = #tpu.pipeline_mode<synchronous>, transform_indices = @transform_1, window_bounds = array<i64: 4, 128>}, {pipeline_mode = #tpu.pipeline_mode<synchronous>, transform_indices = @transform_2, window_bounds = array<i64: 1, 128>}, {pipeline_mode = #tpu.pipeline_mode<synchronous>, transform_indices = @transform_3, window_bounds = array<i64: 128, 128>}, {pipeline_mode = #tpu.pipeline_mode<synchronous>, transform_indices = @transform_4, window_bounds = array<i64: 1, 128>}, {transform_indices = @transform_5, window_bounds = array<i64: 8, 2>}, {transform_indices = @transform_6, window_bounds = array<i64: 8, 1>}]} {
    %c0 = arith.constant 0 : index
    %c0_0 = arith.constant 0 : index
    %0 = vector.load %arg1[%c0, %c0_0] : memref<8x4xf32, #tpu.memory_space<vmem>>, vector<8x4xf32>
    %c0_1 = arith.constant 0 : index
    %c0_2 = arith.constant 0 : index
    %1 = vector.load %arg2[%c0_1, %c0_2] : memref<4x128xf32, #tpu.memory_space<vmem>>, vector<4x128xf32>
    %2 = vector.extract_strided_slice %0 {offsets = [0, 0], sizes = [8, 1], strides = [1, 1]} : vector<8x4xf32> to vector<8x1xf32>
    %3 = vector.extract_strided_slice %1 {offsets = [0, 0], sizes = [1, 128], strides = [1, 1]} : vector<4x128xf32> to vector<1x128xf32>
    %4 = vector.broadcast %2 : vector<8x1xf32> to vector<8x128xf32>
    %5 = vector.broadcast %3 : vector<1x128xf32> to vector<8x128xf32>
    %6 = arith.mulf %4, %5 : vector<8x128xf32>
    %7 = vector.extract_strided_slice %0 {offsets = [0, 1], sizes = [8, 1], strides = [1, 1]} : vector<8x4xf32> to vector<8x1xf32>
    %8 = vector.extract_strided_slice %1 {offsets = [1, 0], sizes = [1, 128], strides = [1, 1]} : vector<4x128xf32> to vector<1x128xf32>
    %9 = vector.broadcast %7 : vector<8x1xf32> to vector<8x128xf32>
    %10 = vector.broadcast %8 : vector<1x128xf32> to vector<8x128xf32>
    %11 = arith.mulf %9, %10 : vector<8x128xf32>
    %12 = arith.addf %6, %11 : vector<8x128xf32>
    %13 = vector.extract_strided_slice %0 {offsets = [0, 2], sizes = [8, 1], strides = [1, 1]} : vector<8x4xf32> to vector<8x1xf32>
    %14 = vector.extract_strided_slice %1 {offsets = [2, 0], sizes = [1, 128], strides = [1, 1]} : vector<4x128xf32> to vector<1x128xf32>
    %15 = vector.broadcast %13 : vector<8x1xf32> to vector<8x128xf32>
    %16 = vector.broadcast %14 : vector<1x128xf32> to vector<8x128xf32>
    %17 = arith.mulf %15, %16 : vector<8x128xf32>
    %18 = arith.addf %12, %17 : vector<8x128xf32>
    %19 = vector.extract_strided_slice %0 {offsets = [0, 3], sizes = [8, 1], strides = [1, 1]} : vector<8x4xf32> to vector<8x1xf32>
    %20 = vector.extract_strided_slice %1 {offsets = [3, 0], sizes = [1, 128], strides = [1, 1]} : vector<4x128xf32> to vector<1x128xf32>
    %21 = vector.broadcast %19 : vector<8x1xf32> to vector<8x128xf32>
    %22 = vector.broadcast %20 : vector<1x128xf32> to vector<8x128xf32>
    %23 = arith.mulf %21, %22 : vector<8x128xf32>
    %24 = arith.addf %18, %23 : vector<8x128xf32>
    %c0_3 = arith.constant 0 : index
    %c0_4 = arith.constant 0 : index
    %25 = vector.load %arg3[%c0_3, %c0_4] : memref<1x128xf32, #tpu.memory_space<vmem>>, vector<1x128xf32>
    %26 = vector.broadcast %25 : vector<1x128xf32> to vector<8x128xf32>
    %27 = arith.addf %24, %26 : vector<8x128xf32>
    %cst = arith.constant 0.000000e+00 : f32
    %28 = vector.broadcast %cst : f32 to vector<8x128xf32>
    %29 = arith.maximumf %27, %28 : vector<8x128xf32>
    %c0_5 = arith.constant 0 : index
    %c0_6 = arith.constant 0 : index
    %30 = vector.load %arg4[%c0_5, %c0_6] : memref<128x128xf32, #tpu.memory_space<vmem>>, vector<128x128xf32>
    %cst_7 = arith.constant dense<0.000000e+00> : vector<8x128xf32>
    %31 = tpu.matmul %29, %30, %cst_7 {dimension_numbers = #tpu.dot_dimension_numbers<[1], [0], [0], [1], [0, 0, 1, 1], [], []>} : vector<8x128xf32>, vector<128x128xf32>, vector<8x128xf32> -> vector<8x128xf32>
    %c0_8 = arith.constant 0 : index
    %c0_9 = arith.constant 0 : index
    %32 = vector.load %arg5[%c0_8, %c0_9] : memref<1x128xf32, #tpu.memory_space<vmem>>, vector<1x128xf32>
    %33 = vector.extract_strided_slice %31 {offsets = [0, 0], sizes = [8, 1], strides = [1, 1]} : vector<8x128xf32> to vector<8x1xf32>
    %34 = vector.extract_strided_slice %32 {offsets = [0, 0], sizes = [1, 1], strides = [1, 1]} : vector<1x128xf32> to vector<1x1xf32>
    %35 = vector.broadcast %34 : vector<1x1xf32> to vector<8x1xf32>
    %36 = arith.addf %33, %35 : vector<8x1xf32>
    %37 = vector.extract_strided_slice %31 {offsets = [0, 1], sizes = [8, 1], strides = [1, 1]} : vector<8x128xf32> to vector<8x1xf32>
    %38 = vector.extract_strided_slice %32 {offsets = [0, 1], sizes = [1, 1], strides = [1, 1]} : vector<1x128xf32> to vector<1x1xf32>
    %39 = vector.broadcast %38 : vector<1x1xf32> to vector<8x1xf32>
    %40 = arith.addf %37, %39 : vector<8x1xf32>
    %41 = vector.extract_strided_slice %31 {offsets = [0, 2], sizes = [8, 1], strides = [1, 1]} : vector<8x128xf32> to vector<8x1xf32>
    %42 = vector.extract_strided_slice %32 {offsets = [0, 2], sizes = [1, 1], strides = [1, 1]} : vector<1x128xf32> to vector<1x1xf32>
    %43 = vector.broadcast %42 : vector<1x1xf32> to vector<8x1xf32>
    %44 = arith.addf %41, %43 : vector<8x1xf32>
    %45 = arith.subf %40, %36 : vector<8x1xf32>
    %46 = math.exp %45 : vector<8x1xf32>
    %cst_10 = arith.constant 1.000000e+00 : f32
    %47 = vector.broadcast %cst_10 : f32 to vector<8x1xf32>
    %48 = arith.addf %47, %46 : vector<8x1xf32>
    %cst_11 = arith.constant 1.000000e+00 : f32
    %49 = vector.broadcast %cst_11 : f32 to vector<8x1xf32>
    %50 = arith.divf %49, %48 : vector<8x1xf32>
    %cst_12 = arith.constant 1.000000e+00 : f32
    %51 = vector.broadcast %cst_12 : f32 to vector<8x1xf32>
    %52 = arith.subf %51, %50 : vector<8x1xf32>
    %53 = tpu.concatenate %50, %52 in 1 : vector<8x1xf32>, vector<8x1xf32> -> vector<8x2xf32>
    %c0_13 = arith.constant 0 : index
    %c0_14 = arith.constant 0 : index
    %54 = vector.load %arg6[%c0_13, %c0_14] : memref<8x2xf32, #tpu.memory_space<vmem>>, vector<8x2xf32>
    tpu.vector_store %arg6[%c0_13, %c0_14], %53 {strides = array<i32>} : memref<8x2xf32, #tpu.memory_space<vmem>>, vector<8x2xf32>,
    %c0_15 = arith.constant 0 : index
    %c0_16 = arith.constant 0 : index
    %55 = vector.load %arg7[%c0_15, %c0_16] : memref<8x1xf32, #tpu.memory_space<vmem>>, vector<8x1xf32>
    tpu.vector_store %arg7[%c0_15, %c0_16], %44 {strides = array<i32>} : memref<8x1xf32, #tpu.memory_space<vmem>>, vector<8x1xf32>,
    return
  }
  func.func @transform_0(%arg0: i32) -> (i32, i32) {
    %c0_i32 = arith.constant 0 : i32
    %c0_i32_0 = arith.constant 0 : i32
    return %arg0, %c0_i32 : i32, i32
  }
  func.func @transform_1(%arg0: i32) -> (i32, i32) {
    %c0_i32 = arith.constant 0 : i32
    %c0_i32_0 = arith.constant 0 : i32
    %c0_i32_1 = arith.constant 0 : i32
    return %c0_i32, %c0_i32_0 : i32, i32
  }
  func.func @transform_2(%arg0: i32) -> (i32, i32) {
    %c0_i32 = arith.constant 0 : i32
    %c0_i32_0 = arith.constant 0 : i32
    %c0_i32_1 = arith.constant 0 : i32
    return %c0_i32, %c0_i32_0 : i32, i32
  }
  func.func @transform_3(%arg0: i32) -> (i32, i32) {
    %c0_i32 = arith.constant 0 : i32
    %c0_i32_0 = arith.constant 0 : i32
    %c0_i32_1 = arith.constant 0 : i32
    return %c0_i32, %c0_i32_0 : i32, i32
  }
  func.func @transform_4(%arg0: i32) -> (i32, i32) {
    %c0_i32 = arith.constant 0 : i32
    %c0_i32_0 = arith.constant 0 : i32
    %c0_i32_1 = arith.constant 0 : i32
    return %c0_i32, %c0_i32_0 : i32, i32
  }
  func.func @transform_5(%arg0: i32) -> (i32, i32) {
    %c0_i32 = arith.constant 0 : i32
    %c0_i32_0 = arith.constant 0 : i32
    return %arg0, %c0_i32 : i32, i32
  }
  func.func @transform_6(%arg0: i32) -> (i32, i32) {
    %c0_i32 = arith.constant 0 : i32
    %c0_i32_0 = arith.constant 0 : i32
    return %arg0, %c0_i32 : i32, i32
  }
}

</mosaic_0001>

<llo_original>
// kernel: policy_forward.1
$region0: #{policy_forward.1}
  #allocation0 [shape = 'u32[]', space=smem, size = 0x4, offset = 0x4, fixed_abs, tag = 'smem constant byte address 0x4 - core index']
  #allocation1 [shape = 'u32[72,128]{1,0:T(1,128)}', space=vmem, size = 0x9000, scoped, tag = 'internal scratch']
  %s0 = inlined_call_operand.vmem [shape: f32[8,4], index: 0, kind: input, shape index: {}]
  %s1 = inlined_call_operand.vmem [shape: f32[4,128], index: 1, kind: input, shape index: {}]
  %s2 = inlined_call_operand.vmem [shape: f32[1,128], index: 2, kind: input, shape index: {}]
  %s3 = inlined_call_operand.hbm [shape: f32[128,128], index: 3, kind: input, shape index: {}]
  %s4 = inlined_call_operand.vmem [shape: f32[1,128], index: 4, kind: input, shape index: {}]
  %s5 = inlined_call_operand.vmem [shape: f32[8,2], index: 5, kind: output, shape index: {0}]
  %s6 = inlined_call_operand.vmem [shape: f32[8,1], index: 6, kind: output, shape index: {1}]
  %7 = xla_tuple %s5, %s6
  %s8 = sld [smem:[#allocation0]]
  $region42: #{policy_forward.1} parent=0
    _
  %s10 = ssub.s32 1, %s8
  %s11 = scalar_select 0, %s10, %s8
  $region1: #{policy_forward.1} parent=0
    #allocation2 [shape = 'u8[65536]{0}', space=vmem, size = 0x10000, scoped, tag = 'input window, operand 3, single buffered']
    #allocation3 [shape = 's32[1]{0}', space=sflag, size = 0x4, scoped, tag = 'scoped memory for policy_forward.1']
    %12 = vsyncpa [#allocation3], 0
    // Predicated region
    $region2: #{policy_forward.1} parent=1 // pred_check
      _
    $region3: #{policy_forward.1} parent=1 // pred_check_branch
      %14 = sbr.rel (0) target = $region5
    $region4: #{policy_forward.1} parent=1 // pred_region
      _
    $region5: #{policy_forward.1} parent=1 // pred_fallthru
      _
    // Predicated region
    $region6: #{policy_forward.1} parent=1 // pred_check
      _
    $region7: #{policy_forward.1} parent=1 // pred_check_branch
      %16 = sbr.rel (0) target = $region9
    $region8: #{policy_forward.1} parent=1 // pred_region
      _
    $region9: #{policy_forward.1} parent=1 // pred_fallthru
      _
    // Predicated region
    $region10: #{policy_forward.1} parent=1 // pred_check
      _
    $region11: #{policy_forward.1} parent=1 // pred_check_branch
      %18 = sbr.rel (0) target = $region13
    $region12: #{policy_forward.1} parent=1 // pred_region
      _
    $region13: #{policy_forward.1} parent=1 // pred_fallthru
      _
    // Predicated region
    $region14: #{policy_forward.1} parent=1 // pred_check
      _
    $region15: #{policy_forward.1} parent=1 // pred_check_branch
      %20 = sbr.rel (0) target = $region17
    $region16: #{policy_forward.1} parent=1 // pred_region
      %22 = vsyncadd [#allocation3], 0
      %s23 = sshll.u32 %s3, 4
      %s24 = int_to_ptr.hbm [resolvable:$true] %s23
      %s25 = sshll.u32 [#allocation2], 4
      %s26 = int_to_ptr.vmem [resolvable:$true] %s25
      %31 = dma.hbm_to_vmem [thread:$0]  %s24, 2048, %s26, [#allocation3], 128, 128, 8
    $region17: #{policy_forward.1} parent=1 // pred_fallthru
      _
    // Predicated region
    $region18: #{policy_forward.1} parent=1 // pred_check
      _
    $region19: #{policy_forward.1} parent=1 // pred_check_branch
      %33 = sbr.rel (0) target = $region21
    $region20: #{policy_forward.1} parent=1 // pred_region
      _
    $region21: #{policy_forward.1} parent=1 // pred_fallthru
      _
    // Predicated region
    $region22: #{policy_forward.1} parent=1 // pred_check
      _
    $region23: #{policy_forward.1} parent=1 // pred_check_branch
      %35 = sbr.rel (0) target = $region25
    $region24: #{policy_forward.1} parent=1 // pred_region
      %37 = dma.done [#allocation3], 2048
    $region25: #{policy_forward.1} parent=1 // pred_fallthru
      _
    %v38 = vld [vmem:[%s0] sm:$0xff]
    %v39 = vld [vmem:[%s1] sm:$0xf]
    %41 = vset.pattern.permute.xlu0 0
    %42 = vperm.xlu0 %41, %v38
    %v43 = vpop.permute.xlu0 %42
    %v45 = vperm.slane %v39, 0
    %v46 = vmul.f32 %v43, %v45
    %47 = vset.pattern.permute.xlu0 1
    %48 = vperm.xlu0 %47, %v38
    %v49 = vpop.permute.xlu0 %48
    %v51 = vperm.slane %v39, 1
    %v52 = vmul.f32 %v49, %v51
    %v53 = vadd.f32 %v46, %v52
    %54 = vset.pattern.permute.xlu0 2
    %55 = vperm.xlu0 %54, %v38
    %v56 = vpop.permute.xlu0 %55
    %v58 = vperm.slane %v39, 2
    %v59 = vmul.f32 %v56, %v58
    %v60 = vadd.f32 %v53, %v59
    %61 = vset.pattern.permute.xlu0 3
    %62 = vperm.xlu0 %61, %v38
    %v63 = vpop.permute.xlu0 %62
    %v65 = vperm.slane %v39, 3
    %v66 = vmul.f32 %v63, %v65
    %v67 = vadd.f32 %v60, %v66
    %v68 = vld [vmem:[%s2] sm:$0x1]
    %v70 = vperm.slane %v68, 0
    %v72 = vadd.f32 %v67, %v70
    %v73 = vmax.f32 %v72, 0.0
    %v74 = vld [vmem:[#allocation2] sm:$0xff]
    %v75 = vld [vmem:[#allocation2 + $0x8] sm:$0xff]
    %v76 = vld [vmem:[#allocation2 + $0x10] sm:$0xff]
    %v77 = vld [vmem:[#allocation2 + $0x18] sm:$0xff]
    %v78 = vld [vmem:[#allocation2 + $0x20] sm:$0xff]
    %v79 = vld [vmem:[#allocation2 + $0x28] sm:$0xff]
    %v80 = vld [vmem:[#allocation2 + $0x30] sm:$0xff]
    %v81 = vld [vmem:[#allocation2 + $0x38] sm:$0xff]
    %v82 = vld [vmem:[#allocation2 + $0x40] sm:$0xff]
    %v83 = vld [vmem:[#allocation2 + $0x48] sm:$0xff]
    %v84 = vld [vmem:[#allocation2 + $0x50] sm:$0xff]
    %v85 = vld [vmem:[#allocation2 + $0x58] sm:$0xff]
    %v86 = vld [vmem:[#allocation2 + $0x60] sm:$0xff]
    %v87 = vld [vmem:[#allocation2 + $0x68] sm:$0xff]
    %v88 = vld [vmem:[#allocation2 + $0x70] sm:$0xff]
    %v89 = vld [vmem:[#allocation2 + $0x78] sm:$0xff]
    %90 = vmatpush.msra.mxu0 %v89
    %91 = vmatpush.msra.mxu0 %v88
    %92 = vmatpush.msra.mxu0 %v87
    %93 = vmatpush.msra.mxu0 %v86
    %94 = vmatpush.msra.mxu0 %v85
    %95 = vmatpush.msra.mxu0 %v84
    %96 = vmatpush.msra.mxu0 %v83
    %97 = vmatpush.msra.mxu0 %v82
    %98 = vmatpush.msra.mxu0 %v81
    %99 = vmatpush.msra.mxu0 %v80
    %100 = vmatpush.msra.mxu0 %v79
    %101 = vmatpush.msra.mxu0 %v78
    %102 = vmatpush.msra.mxu0 %v77
    %103 = vmatpush.msra.mxu0 %v76
    %104 = vmatpush.msra.mxu0 %v75
    %105 = vmatpush.msra.mxu0 %v74
    %106 = vmatmul.f32.gmra.mxu0 %v73
    %v107 = vpop.f32.mrf.mxu0
    %v108 = vadd.f32 0.0, %v107
    %109 = vdwg.mxu0
    %v110 = vld [vmem:[%s4] sm:$0x1]
    %v112 = vperm.slane %v110, 0
    %v114 = vadd.f32 %v108, %v112
    %116 = vrot.lane.b32.xlu0 %v114, 1
    %v117 = vpop.permute.xlu0 %116
    %v119 = vsub.f32 %v114, %v117
    %v120 = vmul.f32 %v119, 1.442695
    %v121 = vpow.pop %v120
    %v122 = vadd.f32 %v121, 1.0
    %v123 = vrcp.pop %v122
    %v124 = vmul.f32 %v122, %v123
    %v125 = vsub.f32 1.0, %v124
    %v126 = vmul.f32 %v123, %v125
    %v127 = vadd.f32 %v123, %v126
    %vm128 = vweird.f32 %v122
    %vm129 = vweird.f32 %v123
    %vm130 = vmor %vm128, %vm129
    %v131 = vsel %vm130, %v123, %v127
    %v132 = vand.u32 2147483647, %v122
    %vm133 = vcmp.eq.f32.partialorder %v132, 8.507059e+37
    %v134 = vand.u32 %v122, 2147483648
    %v135 = vor.u32 1.1754944e-38, %v134
    %v136 = vsel %vm133, %v135, %v131
    %v137 = vmul.f32 1.0, %v136
    %v138 = vsub.f32 1.0, %v137
    %140 = vrot.lane.b32.xlu0 %v137, 127
    %v141 = vpop.permute.xlu0 %140
    %vm143 = vcmask 7168
    %v144 = vsel %vm143, %v141, %v138
    %vm145 = vcmask 15360
    %146 = vst.msk [vmem:[%s5] sm:$0xff] %vm145, %v144
    %147 = vrot.lane.b32.xlu0 %v114, 126
    %v148 = vpop.permute.xlu0 %147
    %150 = vst.msk [vmem:[%s6] sm:$0xff] %vm143, %v148
    // Predicated region
    $region26: #{policy_forward.1} parent=1 // pred_check
      _
    $region27: #{policy_forward.1} parent=1 // pred_check_branch
      %152 = sbr.rel (0) target = $region29
    $region28: #{policy_forward.1} parent=1 // pred_region
      _
    $region29: #{policy_forward.1} parent=1 // pred_fallthru
      _
    // Predicated region
    $region30: #{policy_forward.1} parent=1 // pred_check
      _
    $region31: #{policy_forward.1} parent=1 // pred_check_branch
      %154 = sbr.rel (0) target = $region33
    $region32: #{policy_forward.1} parent=1 // pred_region
      _
    $region33: #{policy_forward.1} parent=1 // pred_fallthru
      _
    // Predicated region
    $region34: #{policy_forward.1} parent=1 // pred_check
      _
    $region35: #{policy_forward.1} parent=1 // pred_check_branch
      %156 = sbr.rel (0) target = $region37
    $region36: #{policy_forward.1} parent=1 // pred_region
      _
    $region37: #{policy_forward.1} parent=1 // pred_fallthru
      _
    // Predicated region
    $region38: #{policy_forward.1} parent=1 // pred_check
      _
    $region39: #{policy_forward.1} parent=1 // pred_check_branch
      %158 = sbr.rel (0) target = $region41
    $region40: #{policy_forward.1} parent=1 // pred_region
      _
    $region41: #{policy_forward.1} parent=1 // pred_fallthru
      _
    %159 = vsyncpa [#allocation3], 1

</llo_original>
